<compile_context>
chip_gen: v5e
topology: v5e:2x2
jax: 0.10.0
libtpu: 0.0.40
codegen_flags: <defaults>
</compile_context>

<pallas_src>
import functools

import jax
import jax.numpy as jnp
from jax.experimental import pallas as pl
from jax.experimental.pallas import tpu as pltpu

LN_EPS = 1e-6  # LayerNorm eps (onmt-style LayerNorm uses 1e-6)


def _round_up(x, m):
    return (x + m - 1) // m * m


def _vmem_capacity():
    try:
        return int(pltpu.get_tpu_info().vmem_capacity_bytes)
    except Exception:
        return 64 << 20  # conservative fallback (v7x per-TensorCore VMEM)


def _pick_f_tile(F_p, cap):
    """Largest divisor of F_p that is <= cap, preferring 256-multiples (v6e/v7x MXU),
    falling back to 128-multiples (v5e)."""
    cap = min(cap, F_p)
    for align in (256, 128):
        tf = (cap // align) * align
        while tf >= align:
            if F_p % tf == 0:
                return tf
            tf -= align
    return F_p


def _choose_tiles(rows, D, F_p, x_itemsize, c_itemsize, tm_req, tf_cap, vmem_cap):
    """Pick (row tile, d_ff tile) under a generation-aware VMEM budget."""
    budget = int(vmem_cap * 0.70)

    def weight_bytes(tf):
        # w1 (D,tf) + w2 (tf,D) chunks, double-buffered by the pipeline.
        # (With tf == F_p the constant index map means they are DMA'd only once; the
        #  second buffer is just VMEM cost, which this budget already accounts for.)
        return 2 * 2 * D * tf * c_itemsize

    def row_bytes(tm, tf):
        return (2 * 2 * tm * D * x_itemsize      # x in + out blocks, double-buffered
                + tm * D * (c_itemsize + 4)       # xn scratch + f32 accumulator
                + tm * tf * (4 + c_itemsize)      # h intermediate (f32 + compute-dtype cast)
                + tm * D * 4)                     # second-matmul f32 intermediate

    # ---- d_ff tile: weight-resident (tf = F_p) when it fits, else largest divisor ----
    cap = F_p if tf_cap is None else max(128, min(tf_cap, F_p))
    tf = _pick_f_tile(F_p, cap)
    min_tm = min(256, _round_up(rows, 8))
    while tf > 128 and weight_bytes(tf) + row_bytes(min_tm, tf) > budget:
        tf = _pick_f_tile(F_p, max(128, tf // 2))

    # ---- row tile: as large as the remaining budget allows ----
    if tm_req is None:
        # 128-MiB VMEM parts (v5e/v6e) vs 64-MiB parts (v7x)
        tm_req = 1024 if vmem_cap > (72 << 20) else 512
    tm = min(tm_req, _round_up(rows, 8))
    while tm > 256 and weight_bytes(tf) + row_bytes(tm, tf) > budget:
        tm -= 256
    if tm >= 256:
        tm = (tm // 256) * 256       # 256-multiple M for the 256x256 MXUs
    else:
        tm = _round_up(tm, 8)        # tiny inputs: f32 sublane alignment

    # Ensure >= 2 row tiles when there are enough rows, so the "parallel" row axis
    # actually shards across v7x's two TensorCores (harmless on v5e/v6e).
    if rows >= 16 and -(-rows // tm) < 2:
        half = _round_up((rows + 1) // 2, 8)
        tm = (half // 256) * 256 if half >= 256 else half

    return tm, tf


def ffn_kernel(x_ref, g_ref, b_ref, w1_ref, b1_ref, w2_ref, b2_ref, o_ref,
               xn_ref, acc_ref):
    # grid = (row_tiles, f_chunks); f (reduction over d_ff chunks) is the trailing axis.
    f = pl.program_id(1)
    nf = pl.num_programs(1)

    @pl.when(f == 0)
    def _():
        # LayerNorm once per row tile; stats in f32, xn stored in the matmul dtype.
        x = x_ref[...].astype(jnp.float32)
        mean = jnp.mean(x, axis=-1, keepdims=True)
        cent = x - mean
        var = jnp.mean(cent * cent, axis=-1, keepdims=True)
        xn = cent * jax.lax.rsqrt(var + LN_EPS)
        xn = xn * g_ref[...].astype(jnp.float32) + b_ref[...].astype(jnp.float32)
        xn_ref[...] = xn.astype(xn_ref.dtype)

    # ---- w_1 chunk: (D -> tf) + bias + ReLU ----
    h = jnp.dot(xn_ref[...], w1_ref[...], preferred_element_type=jnp.float32)
    h = jnp.maximum(h + b1_ref[...].astype(jnp.float32), 0.0)
    # TODO(synk): relu_dropout is identity (inference semantics).

    # ---- w_2 chunk: (tf -> D), accumulated in f32 (no explicit zero-init store) ----
    d = jnp.dot(h.astype(w2_ref.dtype), w2_ref[...], preferred_element_type=jnp.float32)

    @pl.when(f == 0)
    def _():
        acc_ref[...] = d

    @pl.when(f > 0)
    def _():
        acc_ref[...] += d

    @pl.when(f == nf - 1)
    def _():
        # TODO(synk): residual_dropout is identity (inference semantics).
        y = acc_ref[...] + b2_ref[...].astype(jnp.float32) + x_ref[...].astype(jnp.float32)
        o_ref[...] = y.astype(o_ref.dtype)


@functools.partial(jax.jit, static_argnames=("tm", "tf_cap", "compute_dtype"))
def positionwise_ffn(x, gamma, beta, w1, b1, w2, b2, *,
                     tm=None, tf_cap=None, compute_dtype=jnp.bfloat16):
    """x: [B, L, D] -> [B, L, D]. Weights are [in_dim, out_dim]; 1-D params accepted."""
    B, L, D = x.shape
    F = w1.shape[-1]
    rows = B * L

    c_dtype = jnp.dtype(compute_dtype)
    c_itemsize = c_dtype.itemsize
    x_itemsize = jnp.dtype(x.dtype).itemsize

    # Pad d_ff to a tileable width (zero padding is exact: ReLU(0)*w2 contributes nothing).
    F_p = F if F % 128 == 0 else _round_up(F, 256)

    vmem_cap = _vmem_capacity()
    tm_eff, tf = _choose_tiles(rows, D, F_p, x_itemsize, c_itemsize, tm, tf_cap, vmem_cap)
    rows_p = _round_up(rows, tm_eff)

    # 2-D views, padding and compute-dtype casts (bf16 MXU path by default).
    x2d = x.reshape(rows, D)
    if rows_p != rows:
        x2d = jnp.pad(x2d, ((0, rows_p - rows), (0, 0)))

    gamma2 = gamma.reshape(1, D)
    beta2 = beta.reshape(1, D)
    b2_2 = b2.reshape(1, D)

    w1c, b1_1, w2c = w1, b1, w2
    if F_p != F:
        w1c = jnp.pad(w1c, ((0, 0), (0, F_p - F)))
        b1_1 = jnp.pad(b1_1, ((0, F_p - F),))
        w2c = jnp.pad(w2c, ((0, F_p - F), (0, 0)))
    w1c = w1c.astype(c_dtype)
    w2c = w2c.astype(c_dtype)
    b1_2 = b1_1.reshape(1, F_p)

    grid = (rows_p // tm_eff, F_p // tf)
    resident_weights = (tf == F_p)   # constant weight block index -> DMA'd once

    flops = int(4 * rows_p * D * F_p)
    weight_passes = 1 if resident_weights else grid[0]
    bytes_accessed = int(2 * rows_p * D * x_itemsize
                         + weight_passes * 2 * D * F_p * c_itemsize
                         + (3 * D + F_p) * 4)
    cost = pl.CostEstimate(flops=flops, transcendentals=int(rows_p),
                           bytes_accessed=bytes_accessed)

    out2d = pl.pallas_call(
        ffn_kernel,
        out_shape=jax.ShapeDtypeStruct((rows_p, D), x.dtype),
        grid_spec=pltpu.PrefetchScalarGridSpec(
            num_scalar_prefetch=0,
            grid=grid,
            in_specs=[
                pl.BlockSpec((tm_eff, D), lambda i, f: (i, 0)),   # x rows (resident over f)
                pl.BlockSpec((1, D), lambda i, f: (0, 0)),        # ln gamma
                pl.BlockSpec((1, D), lambda i, f: (0, 0)),        # ln beta
                pl.BlockSpec((D, tf), lambda i, f: (0, f)),       # w1 chunk (constant if tf==F_p)
                pl.BlockSpec((1, tf), lambda i, f: (0, f)),       # b1 chunk
                pl.BlockSpec((tf, D), lambda i, f: (f, 0)),       # w2 chunk (constant if tf==F_p)
                pl.BlockSpec((1, D), lambda i, f: (0, 0)),        # b2
            ],
            out_specs=pl.BlockSpec((tm_eff, D), lambda i, f: (i, 0)),
            scratch_shapes=[
                pltpu.VMEM((tm_eff, D), c_dtype),      # normalized rows, reused across f
                pltpu.VMEM((tm_eff, D), jnp.float32),  # f32 output accumulator
            ],
        ),
        compiler_params=pltpu.CompilerParams(
            dimension_semantics=("parallel", "arbitrary"),
            vmem_limit_bytes=int(min(vmem_cap * 0.9, 100 << 20)),
        ),
        cost_estimate=cost,
    )(x2d, gamma2, beta2, w1c, b1_2, w2c, b2_2)

    if rows_p != rows:
        out2d = out2d[:rows]
    return out2d.reshape(B, L, D)


def reference_ffn(x, gamma, beta, w1, b1, w2, b2):
    xf = x.astype(jnp.float32)
    mean = jnp.mean(xf, -1, keepdims=True)
    var = jnp.mean((xf - mean) ** 2, -1, keepdims=True)
    xn = (xf - mean) * jax.lax.rsqrt(var + LN_EPS) * gamma + beta
    h = jnp.maximum(xn @ w1 + b1, 0.0)
    return (h @ w2 + b2 + xf).astype(x.dtype)


if __name__ == "__main__":
    # Small but lane-dense shapes; L=7 makes B*L=14 exercise the row-padding path.
    B, L, d_model, d_ff = 2, 7, 128, 256

    key = jax.random.PRNGKey(0)
    kx, k1, k2, k3, k4, k5, k6 = jax.random.split(key, 7)

    x = jax.random.normal(kx, (B, L, d_model), dtype=jnp.float32)
    gamma = 1.0 + 0.1 * jax.random.normal(k5, (d_model,), jnp.float32)
    beta = 0.1 * jax.random.normal(k6, (d_model,), jnp.float32)
    w1 = jax.random.normal(k1, (d_model, d_ff), jnp.float32) / jnp.sqrt(d_model)
    b1 = jax.random.normal(k2, (d_ff,), jnp.float32) * 0.01
    w2 = jax.random.normal(k3, (d_ff, d_model), jnp.float32) / jnp.sqrt(d_ff)
    b2 = jax.random.normal(k4, (d_model,), jnp.float32) * 0.01

    ref = reference_ffn(x, gamma, beta, w1, b1, w2, b2)

    # f32 compute path with a forced d_ff split (tf=128): exercises the multi-chunk
    # accumulator path; tight tolerance against the f32 reference.
    out_f32 = positionwise_ffn(x, gamma, beta, w1, b1, w2, b2,
                               compute_dtype=jnp.float32, tf_cap=128)
    out_f32 = jax.block_until_ready(out_f32)
    assert out_f32.shape == (B, L, d_model)
    err32 = float(jnp.max(jnp.abs(out_f32 - ref)))
    assert jnp.allclose(out_f32, ref, atol=2e-4, rtol=2e-4), f"f32 max abs err {err32}"

    # Default path: bf16 MXU compute, weight-resident (tf = d_ff). Looser tolerance
    # because xn / h are rounded to bf16 before the MXU (f32 accumulation kept).
    out_bf16 = positionwise_ffn(x, gamma, beta, w1, b1, w2, b2)
    out_bf16 = jax.block_until_ready(out_bf16)
    assert out_bf16.shape == (B, L, d_model)
    errbf = float(jnp.max(jnp.abs(out_bf16 - ref)))
    assert jnp.allclose(out_bf16, ref, atol=1e-1, rtol=2e-2), f"bf16 max abs err {errbf}"

    print("KERNEL_OK")
</pallas_src>

<mosaic_0001>
module attributes {stable_mosaic.version = 11 : i64} {
  func.func @ffn_kernel(%arg0: i32, %arg1: i32, %arg2: memref<16x128xf32, #tpu.memory_space<vmem>>, %arg3: memref<1x128xf32, #tpu.memory_space<vmem>>, %arg4: memref<1x128xf32, #tpu.memory_space<vmem>>, %arg5: memref<128x128xf32, #tpu.memory_space<vmem>>, %arg6: memref<1x128xf32, #tpu.memory_space<vmem>>, %arg7: memref<128x128xf32, #tpu.memory_space<vmem>>, %arg8: memref<1x128xf32, #tpu.memory_space<vmem>>, %arg9: memref<16x128xf32, #tpu.memory_space<vmem>>, %arg10: memref<16x128xf32, #tpu.memory_space<vmem>>, %arg11: memref<16x128xf32, #tpu.memory_space<vmem>>) attributes {dimension_semantics = [#tpu.dimension_semantics<parallel>, #tpu.dimension_semantics<arbitrary>], iteration_bounds = array<i64: 1, 2>, scalar_prefetch = 0 : i64, scratch_operands = 2 : i64, tpu.core_type = #tpu.core_type<tc>, window_params = [{transform_indices = @transform_0, window_bounds = array<i64: 16, 128>}, {pipeline_mode = #tpu.pipeline_mode<synchronous>, transform_indices = @transform_1, window_bounds = array<i64: 1, 128>}, {pipeline_mode = #tpu.pipeline_mode<synchronous>, transform_indices = @transform_2, window_bounds = array<i64: 1, 128>}, {transform_indices = @transform_3, window_bounds = array<i64: 128, 128>}, {transform_indices = @transform_4, window_bounds = array<i64: 1, 128>}, {transform_indices = @transform_5, window_bounds = array<i64: 128, 128>}, {pipeline_mode = #tpu.pipeline_mode<synchronous>, transform_indices = @transform_6, window_bounds = array<i64: 1, 128>}, {transform_indices = @transform_7, window_bounds = array<i64: 16, 128>}]} {
    %c0_i32 = arith.constant 0 : i32
    %0 = arith.cmpi eq, %arg1, %c0_i32 : i32
    %1 = arith.extui %0 : i1 to i32
    %c0_i32_0 = arith.constant 0 : i32
    %2 = arith.cmpi ne, %1, %c0_i32_0 : i32
    scf.if %2 {
      %c0_15 = arith.constant 0 : index
      %c0_16 = arith.constant 0 : index
      %22 = vector.load %arg2[%c0_15, %c0_16] : memref<16x128xf32, #tpu.memory_space<vmem>>, vector<16x128xf32>
      %cst_17 = arith.constant dense<0.000000e+00> : vector<16xf32>
      %23 = vector.multi_reduction <add>, %22, %cst_17 [1] : vector<16x128xf32> to vector<16xf32>
      %24 = vector.shape_cast %23 : vector<16xf32> to vector<16x1xf32>
      %cst_18 = arith.constant 1.280000e+02 : f32
      %25 = vector.broadcast %cst_18 : f32 to vector<16x1xf32>
      %26 = arith.divf %24, %25 : vector<16x1xf32>
      %27 = vector.broadcast %26 : vector<16x1xf32> to vector<16x128xf32>
      %28 = arith.subf %22, %27 : vector<16x128xf32>
      %29 = arith.mulf %28, %28 : vector<16x128xf32>
      %cst_19 = arith.constant dense<0.000000e+00> : vector<16xf32>
      %30 = vector.multi_reduction <add>, %29, %cst_19 [1] : vector<16x128xf32> to vector<16xf32>
      %31 = vector.shape_cast %30 : vector<16xf32> to vector<16x1xf32>
      %cst_20 = arith.constant 1.280000e+02 : f32
      %32 = vector.broadcast %cst_20 : f32 to vector<16x1xf32>
      %33 = arith.divf %31, %32 : vector<16x1xf32>
      %cst_21 = arith.constant 9.99999997E-7 : f32
      %34 = vector.broadcast %cst_21 : f32 to vector<16x1xf32>
      %35 = arith.addf %33, %34 : vector<16x1xf32>
      %36 = math.rsqrt %35 : vector<16x1xf32>
      %37 = vector.broadcast %36 : vector<16x1xf32> to vector<16x128xf32>
      %38 = arith.mulf %28, %37 : vector<16x128xf32>
      %c0_22 = arith.constant 0 : index
      %c0_23 = arith.constant 0 : index
      %39 = vector.load %arg3[%c0_22, %c0_23] : memref<1x128xf32, #tpu.memory_space<vmem>>, vector<1x128xf32>
      %40 = vector.broadcast %39 : vector<1x128xf32> to vector<16x128xf32>
      %41 = arith.mulf %38, %40 : vector<16x128xf32>
      %c0_24 = arith.constant 0 : index
      %c0_25 = arith.constant 0 : index
      %42 = vector.load %arg4[%c0_24, %c0_25] : memref<1x128xf32, #tpu.memory_space<vmem>>, vector<1x128xf32>
      %43 = vector.broadcast %42 : vector<1x128xf32> to vector<16x128xf32>
      %44 = arith.addf %41, %43 : vector<16x128xf32>
      %c0_26 = arith.constant 0 : index
      %c0_27 = arith.constant 0 : index
      %45 = vector.load %arg10[%c0_26, %c0_27] : memref<16x128xf32, #tpu.memory_space<vmem>>, vector<16x128xf32>
      tpu.vector_store %arg10[%c0_26, %c0_27], %44 {strides = array<i32>} : memref<16x128xf32, #tpu.memory_space<vmem>>, vector<16x128xf32>,
    } else {
    }
    %c0 = arith.constant 0 : index
    %c0_1 = arith.constant 0 : index
    %3 = vector.load %arg10[%c0, %c0_1] : memref<16x128xf32, #tpu.memory_space<vmem>>, vector<16x128xf32>
    %c0_2 = arith.constant 0 : index
    %c0_3 = arith.constant 0 : index
    %4 = vector.load %arg5[%c0_2, %c0_3] : memref<128x128xf32, #tpu.memory_space<vmem>>, vector<128x128xf32>
    %cst = arith.constant dense<0.000000e+00> : vector<16x128xf32>
    %5 = tpu.matmul %3, %4, %cst {dimension_numbers = #tpu.dot_dimension_numbers<[1], [0], [0], [1], [0, 0, 1, 1], [], []>} : vector<16x128xf32>, vector<128x128xf32>, vector<16x128xf32> -> vector<16x128xf32>
    %c0_4 = arith.constant 0 : index
    %c0_5 = arith.constant 0 : index
    %6 = vector.load %arg6[%c0_4, %c0_5] : memref<1x128xf32, #tpu.memory_space<vmem>>, vector<1x128xf32>
    %7 = vector.broadcast %6 : vector<1x128xf32> to vector<16x128xf32>
    %8 = arith.addf %5, %7 : vector<16x128xf32>
    %cst_6 = arith.constant 0.000000e+00 : f32
    %9 = vector.broadcast %cst_6 : f32 to vector<16x128xf32>
    %10 = arith.maximumf %8, %9 : vector<16x128xf32>
    %c0_7 = arith.constant 0 : index
    %c0_8 = arith.constant 0 : index
    %11 = vector.load %arg7[%c0_7, %c0_8] : memref<128x128xf32, #tpu.memory_space<vmem>>, vector<128x128xf32>
    %cst_9 = arith.constant dense<0.000000e+00> : vector<16x128xf32>
    %12 = tpu.matmul %10, %11, %cst_9 {dimension_numbers = #tpu.dot_dimension_numbers<[1], [0], [0], [1], [0, 0, 1, 1], [], []>} : vector<16x128xf32>, vector<128x128xf32>, vector<16x128xf32> -> vector<16x128xf32>
    %c0_i32_10 = arith.constant 0 : i32
    %13 = arith.cmpi eq, %arg1, %c0_i32_10 : i32
    %14 = arith.extui %13 : i1 to i32
    %c0_i32_11 = arith.constant 0 : i32
    %15 = arith.cmpi ne, %14, %c0_i32_11 : i32
    scf.if %15 {
      %c0_15 = arith.constant 0 : index
      %c0_16 = arith.constant 0 : index
      %22 = vector.load %arg11[%c0_15, %c0_16] : memref<16x128xf32, #tpu.memory_space<vmem>>, vector<16x128xf32>
      tpu.vector_store %arg11[%c0_15, %c0_16], %12 {strides = array<i32>} : memref<16x128xf32, #tpu.memory_space<vmem>>, vector<16x128xf32>,
    } else {
    }
    %c0_i32_12 = arith.constant 0 : i32
    %16 = arith.cmpi sgt, %arg1, %c0_i32_12 : i32
    %17 = arith.extui %16 : i1 to i32
    %c0_i32_13 = arith.constant 0 : i32
    %18 = arith.cmpi ne, %17, %c0_i32_13 : i32
    scf.if %18 {
      %c0_15 = arith.constant 0 : index
      %c0_16 = arith.constant 0 : index
      %22 = vector.load %arg11[%c0_15, %c0_16] : memref<16x128xf32, #tpu.memory_space<vmem>>, vector<16x128xf32>
      %23 = arith.addf %22, %12 : vector<16x128xf32>
      %c0_17 = arith.constant 0 : index
      %c0_18 = arith.constant 0 : index
      %24 = vector.load %arg11[%c0_17, %c0_18] : memref<16x128xf32, #tpu.memory_space<vmem>>, vector<16x128xf32>
      tpu.vector_store %arg11[%c0_17, %c0_18], %23 {strides = array<i32>} : memref<16x128xf32, #tpu.memory_space<vmem>>, vector<16x128xf32>,
    } else {
    }
    %c1_i32 = arith.constant 1 : i32
    %19 = arith.cmpi eq, %arg1, %c1_i32 : i32
    %20 = arith.extui %19 : i1 to i32
    %c0_i32_14 = arith.constant 0 : i32
    %21 = arith.cmpi ne, %20, %c0_i32_14 : i32
    scf.if %21 {
      %c0_15 = arith.constant 0 : index
      %c0_16 = arith.constant 0 : index
      %22 = vector.load %arg11[%c0_15, %c0_16] : memref<16x128xf32, #tpu.memory_space<vmem>>, vector<16x128xf32>
      %c0_17 = arith.constant 0 : index
      %c0_18 = arith.constant 0 : index
      %23 = vector.load %arg8[%c0_17, %c0_18] : memref<1x128xf32, #tpu.memory_space<vmem>>, vector<1x128xf32>
      %24 = vector.broadcast %23 : vector<1x128xf32> to vector<16x128xf32>
      %25 = arith.addf %22, %24 : vector<16x128xf32>
      %c0_19 = arith.constant 0 : index
      %c0_20 = arith.constant 0 : index
      %26 = vector.load %arg2[%c0_19, %c0_20] : memref<16x128xf32, #tpu.memory_space<vmem>>, vector<16x128xf32>
      %27 = arith.addf %25, %26 : vector<16x128xf32>
      %c0_21 = arith.constant 0 : index
      %c0_22 = arith.constant 0 : index
      %28 = vector.load %arg9[%c0_21, %c0_22] : memref<16x128xf32, #tpu.memory_space<vmem>>, vector<16x128xf32>
      tpu.vector_store %arg9[%c0_21, %c0_22], %27 {strides = array<i32>} : memref<16x128xf32, #tpu.memory_space<vmem>>, vector<16x128xf32>,
    } else {
    }
    return
  }
  func.func @transform_0(%arg0: i32, %arg1: i32) -> (i32, i32) {
    %c0_i32 = arith.constant 0 : i32
    %c0_i32_0 = arith.constant 0 : i32
    return %arg0, %c0_i32 : i32, i32
  }
  func.func @transform_1(%arg0: i32, %arg1: i32) -> (i32, i32) {
    %c0_i32 = arith.constant 0 : i32
    %c0_i32_0 = arith.constant 0 : i32
    %c0_i32_1 = arith.constant 0 : i32
    return %c0_i32, %c0_i32_0 : i32, i32
  }
  func.func @transform_2(%arg0: i32, %arg1: i32) -> (i32, i32) {
    %c0_i32 = arith.constant 0 : i32
    %c0_i32_0 = arith.constant 0 : i32
    %c0_i32_1 = arith.constant 0 : i32
    return %c0_i32, %c0_i32_0 : i32, i32
  }
  func.func @transform_3(%arg0: i32, %arg1: i32) -> (i32, i32) {
    %c0_i32 = arith.constant 0 : i32
    %c0_i32_0 = arith.constant 0 : i32
    return %c0_i32, %arg1 : i32, i32
  }
  func.func @transform_4(%arg0: i32, %arg1: i32) -> (i32, i32) {
    %c0_i32 = arith.constant 0 : i32
    %c0_i32_0 = arith.constant 0 : i32
    return %c0_i32, %arg1 : i32, i32
  }
  func.func @transform_5(%arg0: i32, %arg1: i32) -> (i32, i32) {
    %c0_i32 = arith.constant 0 : i32
    %c0_i32_0 = arith.constant 0 : i32
    return %arg1, %c0_i32 : i32, i32
  }
  func.func @transform_6(%arg0: i32, %arg1: i32) -> (i32, i32) {
    %c0_i32 = arith.constant 0 : i32
    %c0_i32_0 = arith.constant 0 : i32
    %c0_i32_1 = arith.constant 0 : i32
    return %c0_i32, %c0_i32_0 : i32, i32
  }
  func.func @transform_7(%arg0: i32, %arg1: i32) -> (i32, i32) {
    %c0_i32 = arith.constant 0 : i32
    %c0_i32_0 = arith.constant 0 : i32
    return %arg0, %c0_i32 : i32, i32
  }
}

</mosaic_0001>

<llo_original>
// kernel: positionwise_ffn.1
$region0: #{positionwise_ffn.1}
  #allocation0 [shape = 'u32[]', space=smem, size = 0x4, offset = 0x4, fixed_abs, tag = 'smem constant byte address 0x4 - core index']
  #allocation1 [shape = 'u32[72,128]{1,0:T(1,128)}', space=vmem, size = 0x9000, scoped, tag = 'internal scratch']
  #allocation2 [shape = 'f32[16,128]{1,0:T(8,128)}', space=vmem, size = 0x2000, scoped, tag = 'scratch operand']
  #allocation3 [shape = 'f32[16,128]{1,0:T(8,128)}', space=vmem, size = 0x2000, scoped, tag = 'scratch operand']
  %s0 = inlined_call_operand.vmem [shape: f32[16,128], index: 0, kind: input, shape index: {}]
  %s1 = inlined_call_operand.vmem [shape: f32[1,128], index: 1, kind: input, shape index: {}]
  %s2 = inlined_call_operand.vmem [shape: f32[1,128], index: 2, kind: input, shape index: {}]
  %s3 = inlined_call_operand.hbm [shape: f32[128,256], index: 3, kind: input, shape index: {}]
  %s4 = inlined_call_operand.vmem [shape: f32[1,256], index: 4, kind: input, shape index: {}]
  %s5 = inlined_call_operand.hbm [shape: f32[256,128], index: 5, kind: input, shape index: {}]
  %s6 = inlined_call_operand.vmem [shape: f32[1,128], index: 6, kind: input, shape index: {}]
  %s7 = inlined_call_operand.vmem [shape: f32[16,128], index: 7, kind: output, shape index: {}]
  %s8 = sld [smem:[#allocation0]]
  $region85: #{positionwise_ffn.1} parent=0
    _
  %s10 = ssub.s32 1, %s8
  %s11 = scalar_select 0, %s10, %s8
  $region1: #{positionwise_ffn.1} parent=0
    #allocation4 [shape = 'u8[131072]{0}', space=vmem, size = 0x20000, scoped, tag = 'input window, operand 3']
    #allocation5 [shape = 's32[2]{0}', space=sflag, size = 0x8, scoped, tag = 'scoped memory for positionwise_ffn.1']
    #allocation6 [shape = 'u8[131072]{0}', space=vmem, size = 0x20000, scoped, tag = 'input window, operand 5']
    #allocation7 [shape = 's32[2]{0}', space=sflag, size = 0x8, scoped, tag = 'scoped memory for positionwise_ffn.1']
    %12 = vsyncpa [#allocation5], 0
    %s13 = scalar_lea.sflag [#allocation5], 1
    %14 = vsyncpa %s13, 0
    %15 = vsyncpa [#allocation7], 0
    %s16 = scalar_lea.sflag [#allocation7], 1
    %17 = vsyncpa %s16, 0
    loop: start=0, step=1, limit=4
    $region2: #{positionwise_ffn.1} parent=1 // loop_pre_header
      _
    $region3: #{positionwise_ffn.1} parent=1 // loop_header
      %s19 = sphi 0, %s23
      %p20 = scmp.ge.s32.totalorder %s19, 4
      %s26 = sphi 0, %s38
      %s27 = sphi 0, %s34
      %s28 = sphi 0, %s26
      %s29 = sphi 0, %s27
      %s30 = sphi 0, %s28
      %s31 = sphi 0, %s29
      %s41 = sphi 0, %s43
      %s44 = sphi 0, %s41
      %s45 = sphi 0, %s44
      %s61 = sphi 0, %s45
      %s65 = sphi 0, %s65
      %s67 = sphi 0, %s65
      %s68 = sphi 0, %s67
      %s82 = sphi 0, %s68
      %s86 = sphi 0, %s86
      %s88 = sphi 0, %s86
      %s89 = sphi 0, %s88
      %s103 = sphi 0, %s89
      %s109 = sphi 0, %s111
      %s112 = sphi 0, %s109
      %s113 = sphi 0, %s112
      %s129 = sphi 0, %s113
      %s135 = sphi 0, %s137
      %s138 = sphi 0, %s135
      %s139 = sphi 0, %s138
      %s155 = sphi 0, %s139
      %s161 = sphi 0, %s163
      %s164 = sphi 0, %s161
      %s165 = sphi 0, %s164
      %s181 = sphi 0, %s165
      %s185 = sphi 0, %s185
      %s187 = sphi 0, %s185
      %s188 = sphi 0, %s187
      %s202 = sphi 0, %s188
      %s208 = sphi 0, %s210
      %s211 = sphi 0, %s208
      %s212 = sphi 0, %s211
      %s228 = sphi 0, %s212
    $region4: #{positionwise_ffn.1} parent=1 // loop_header_branch
      %22 = sbr.rel (%p20) target = $region8
    $region5: #{positionwise_ffn.1} parent=1 // loop_body
      %s24 = ssub.s32 %s19, 1
      %s25 = ssub.s32 %s19, 2
      %s32 = sadd.s32 1, %s27
      %p33 = scmp.ge.s32.totalorder %s32, 2
      %s34 = scalar_select %p33, 0, %s32
      %s35 = sadd.s32 1, %s26
      %s36 = scalar_select %p33, %s35, %s26
      %p37 = scmp.ge.s32.totalorder %s36, 1
      %s38 = scalar_select %p37, 0, %s36
      %s39 = ssub.s32 %s26, %s38
      %p40 = scmp.eq.s32.totalorder %s39, 0
      %s42 = sadd.s32 %s41, 1
      %s43 = scalar_select %p40, %s41, %s42
      %p46 = pneg %p40
      %p47 = scmp.eq.s32.totalorder %s19, 1
      %p48 = por %p46, %p47
      %p49 = scmp.ne.s32.totalorder %s41, %s44
      %p50 = scmp.eq.s32.totalorder %s19, 0
      %p51 = por %p49, %p50
      %p52 = scmp.ne.s32.totalorder %s41, %s44
      %p53 = scmp.eq.s32.totalorder %s24, 1
      %p54 = por %p52, %p53
      %p55 = scmp.ne.s32.totalorder %s44, %s45
      %p56 = scmp.eq.s32.totalorder %s24, 0
      %p57 = por %p55, %p56
      %p58 = scmp.ne.s32.totalorder %s44, %s45
      %p59 = scmp.eq.s32.totalorder %s25, 1
      %p60 = por %p58, %p59
      %p62 = scmp.ne.s32.totalorder %s45, %s61
      %p63 = scmp.eq.s32.totalorder %s25, 0
      %p64 = por %p62, %p63
      %s66 = sadd.s32 %s65, 1
      %p69 = scmp.eq.s32.totalorder %s19, 1
      %p70 = scmp.ne.s32.totalorder %s65, %s67
      %p71 = scmp.eq.s32.totalorder %s19, 0
      %p72 = por %p70, %p71
      %p73 = scmp.ne.s32.totalorder %s65, %s67
      %p74 = scmp.eq.s32.totalorder %s24, 1
      %p75 = por %p73, %p74
      %p76 = scmp.ne.s32.totalorder %s67, %s68
      %p77 = scmp.eq.s32.totalorder %s24, 0
      %p78 = por %p76, %p77
      %p79 = scmp.ne.s32.totalorder %s67, %s68
      %p80 = scmp.eq.s32.totalorder %s25, 1
      %p81 = por %p79, %p80
      %p83 = scmp.ne.s32.totalorder %s68, %s82
      %p84 = scmp.eq.s32.totalorder %s25, 0
      %p85 = por %p83, %p84
      %s87 = sadd.s32 %s86, 1
      %p90 = scmp.eq.s32.totalorder %s19, 1
      %p91 = scmp.ne.s32.totalorder %s86, %s88
      %p92 = scmp.eq.s32.totalorder %s19, 0
      %p93 = por %p91, %p92
      %p94 = scmp.ne.s32.totalorder %s86, %s88
      %p95 = scmp.eq.s32.totalorder %s24, 1
      %p96 = por %p94, %p95
      %p97 = scmp.ne.s32.totalorder %s88, %s89
      %p98 = scmp.eq.s32.totalorder %s24, 0
      %p99 = por %p97, %p98
      %p100 = scmp.ne.s32.totalorder %s88, %s89
      %p101 = scmp.eq.s32.totalorder %s25, 1
      %p102 = por %p100, %p101
      %p104 = scmp.ne.s32.totalorder %s89, %s103
      %p105 = scmp.eq.s32.totalorder %s25, 0
      %p106 = por %p104, %p105
      %s107 = ssub.s32 %s27, %s34
      %p108 = scmp.eq.s32.totalorder %s107, 0
      %s110 = sadd.s32 %s109, 1
      %s111 = scalar_select %p108, %s109, %s110
      %p114 = pneg %p108
      %p115 = scmp.eq.s32.totalorder %s19, 1
      %p116 = por %p114, %p115
      %p117 = scmp.ne.s32.totalorder %s109, %s112
      %p118 = scmp.eq.s32.totalorder %s19, 0
      %p119 = por %p117, %p118
      %p120 = scmp.ne.s32.totalorder %s109, %s112
      %p121 = scmp.eq.s32.totalorder %s24, 1
      %p122 = por %p120, %p121
      %p123 = scmp.ne.s32.totalorder %s112, %s113
      %p124 = scmp.eq.s32.totalorder %s24, 0
      %p125 = por %p123, %p124
      %p126 = scmp.ne.s32.totalorder %s112, %s113
      %p127 = scmp.eq.s32.totalorder %s25, 1
      %p128 = por %p126, %p127
      %p130 = scmp.ne.s32.totalorder %s113, %s129
      %p131 = scmp.eq.s32.totalorder %s25, 0
      %p132 = por %p130, %p131
      %s133 = ssub.s32 %s27, %s34
      %p134 = scmp.eq.s32.totalorder %s133, 0
      %s136 = sadd.s32 %s135, 1
      %s137 = scalar_select %p134, %s135, %s136
      %p140 = pneg %p134
      %p141 = scmp.eq.s32.totalorder %s19, 1
      %p142 = por %p140, %p141
      %p143 = scmp.ne.s32.totalorder %s135, %s138
      %p144 = scmp.eq.s32.totalorder %s19, 0
      %p145 = por %p143, %p144
      %p146 = scmp.ne.s32.totalorder %s135, %s138
      %p147 = scmp.eq.s32.totalorder %s24, 1
      %p148 = por %p146, %p147
      %p149 = scmp.ne.s32.totalorder %s138, %s139
      %p150 = scmp.eq.s32.totalorder %s24, 0
      %p151 = por %p149, %p150
      %p152 = scmp.ne.s32.totalorder %s138, %s139
      %p153 = scmp.eq.s32.totalorder %s25, 1
      %p154 = por %p152, %p153
      %p156 = scmp.ne.s32.totalorder %s139, %s155
      %p157 = scmp.eq.s32.totalorder %s25, 0
      %p158 = por %p156, %p157
      %s159 = ssub.s32 %s27, %s34
      %p160 = scmp.eq.s32.totalorder %s159, 0
      %s162 = sadd.s32 %s161, 1
      %s163 = scalar_select %p160, %s161, %s162
      %p166 = pneg %p160
      %p167 = scmp.eq.s32.totalorder %s19, 1
      %p168 = por %p166, %p167
      %p169 = scmp.ne.s32.totalorder %s161, %s164
      %p170 = scmp.eq.s32.totalorder %s19, 0
      %p171 = por %p169, %p170
      %p172 = scmp.ne.s32.totalorder %s161, %s164
      %p173 = scmp.eq.s32.totalorder %s24, 1
      %p174 = por %p172, %p173
      %p175 = scmp.ne.s32.totalorder %s164, %s165
      %p176 = scmp.eq.s32.totalorder %s24, 0
      %p177 = por %p175, %p176
      %p178 = scmp.ne.s32.totalorder %s164, %s165
      %p179 = scmp.eq.s32.totalorder %s25, 1
      %p180 = por %p178, %p179
      %p182 = scmp.ne.s32.totalorder %s165, %s181
      %p183 = scmp.eq.s32.totalorder %s25, 0
      %p184 = por %p182, %p183
      %s186 = sadd.s32 %s185, 1
      %p189 = scmp.eq.s32.totalorder %s19, 1
      %p190 = scmp.ne.s32.totalorder %s185, %s187
      %p191 = scmp.eq.s32.totalorder %s19, 0
      %p192 = por %p190, %p191
      %p193 = scmp.ne.s32.totalorder %s185, %s187
      %p194 = scmp.eq.s32.totalorder %s24, 1
      %p195 = por %p193, %p194
      %p196 = scmp.ne.s32.totalorder %s187, %s188
      %p197 = scmp.eq.s32.totalorder %s24, 0
      %p198 = por %p196, %p197
      %p199 = scmp.ne.s32.totalorder %s187, %s188
      %p200 = scmp.eq.s32.totalorder %s25, 1
      %p201 = por %p199, %p200
      %p203 = scmp.ne.s32.totalorder %s188, %s202
      %p204 = scmp.eq.s32.totalorder %s25, 0
      %p205 = por %p203, %p204
      %s206 = ssub.s32 %s26, %s38
      %p207 = scmp.eq.s32.totalorder %s206, 0
      %s209 = sadd.s32 %s208, 1
      %s210 = scalar_select %p207, %s208, %s209
      %p213 = pneg %p207
      %p214 = scmp.eq.s32.totalorder %s19, 1
      %p215 = por %p213, %p214
      %p216 = scmp.ne.s32.totalorder %s208, %s211
      %p217 = scmp.eq.s32.totalorder %s19, 0
      %p218 = por %p216, %p217
      %p219 = scmp.ne.s32.totalorder %s208, %s211
      %p220 = scmp.eq.s32.totalorder %s24, 1
      %p221 = por %p219, %p220
      %p222 = scmp.ne.s32.totalorder %s211, %s212
      %p223 = scmp.eq.s32.totalorder %s24, 0
      %p224 = por %p222, %p223
      %p225 = scmp.ne.s32.totalorder %s211, %s212
      %p226 = scmp.eq.s32.totalorder %s25, 1
      %p227 = por %p225, %p226
      %p229 = scmp.ne.s32.totalorder %s212, %s228
      %p230 = scmp.eq.s32.totalorder %s25, 0
      %p231 = por %p229, %p230
      %p232 = scmp.le.s32.totalorder 1, %s19
      %p233 = scmp.lt.s32.totalorder %s19, 3
      %p234 = pnand %p232, %p233
      %p235 = pneg %p234
      // Predicated region
      $region9: #{positionwise_ffn.1} parent=5 // pred_check
        _
      $region10: #{positionwise_ffn.1} parent=5 // pred_check_branch
        %237 = sbr.rel (%p234) target = $region12
      $region11: #{positionwise_ffn.1} parent=5 // pred_region
        %s238 = ssub.s32 %s19, 1
        // Predicated region
        $region13: #{positionwise_ffn.1} parent=11 // pred_check
          %p239 = pneg %p57
        $region14: #{positionwise_ffn.1} parent=11 // pred_check_branch
          %241 = sbr.rel (%p239) target = $region16
        $region15: #{positionwise_ffn.1} parent=11 // pred_region
          %s242 = smul.u32 2, %s28
          %p243 = scmp.lt.s32.totalorder %s242, 1
          %s244 = scalar_select %p243, %s242, 1
          %s245 = smul.addr %s244, 8
          %s246 = scalar_lea.vmem %s0, %s245
          %s247 = smul.u32 2, %s28
        $region16: #{positionwise_ffn.1} parent=11 // pred_fallthru
          _
        // Predicated region
        $region17: #{positionwise_ffn.1} parent=11 // pred_check
          %p248 = pneg %p78
        $region18: #{positionwise_ffn.1} parent=11 // pred_check_branch
          %250 = sbr.rel (%p248) target = $region20
        $region19: #{positionwise_ffn.1} parent=11 // pred_region
          _
        $region20: #{positionwise_ffn.1} parent=11 // pred_fallthru
          _
        // Predicated region
        $region21: #{positionwise_ffn.1} parent=11 // pred_check
          %p251 = pneg %p99
        $region22: #{positionwise_ffn.1} parent=11 // pred_check_branch
          %253 = sbr.rel (%p251) target = $region24
        $region23: #{positionwise_ffn.1} parent=11 // pred_region
          _
        $region24: #{positionwise_ffn.1} parent=11 // pred_fallthru
          _
        // Predicated region
        $region25: #{positionwise_ffn.1} parent=11 // pred_check
          %p254 = pneg %p198
        $region26: #{positionwise_ffn.1} parent=11 // pred_check_branch
          %256 = sbr.rel (%p254) target = $region28
        $region27: #{positionwise_ffn.1} parent=11 // pred_region
          _
        $region28: #{positionwise_ffn.1} parent=11 // pred_fallthru
          _
      $region12: #{positionwise_ffn.1} parent=5 // pred_fallthru
        _
      %p257 = scmp.lt.s32.totalorder %s19, 2
      // Predicated region
      $region29: #{positionwise_ffn.1} parent=5 // pred_check
        %p258 = pneg %p257
      $region30: #{positionwise_ffn.1} parent=5 // pred_check_branch
        %260 = sbr.rel (%p258) target = $region32
      $region31: #{positionwise_ffn.1} parent=5 // pred_region
        // Predicated region
        $region33: #{positionwise_ffn.1} parent=31 // pred_check
          %p261 = pneg %p119
        $region34: #{positionwise_ffn.1} parent=31 // pred_check_branch
          %263 = sbr.rel (%p261) target = $region36
        $region35: #{positionwise_ffn.1} parent=31 // pred_region
          %s264 = sand.u32 %s109, 1
          %s265 = scalar_lea.sflag [#allocation5], %s264
          %s266 = sand.u32 %s109, 1
          %s267 = smul.addr %s266, 128
          %s268 = scalar_lea.vmem [#allocation4], %s267
          %270 = vsyncadd %s265, 0
          %s271 = smul.addr %s27, 8
          %s272 = scalar_lea.hbm %s3, %s271
          %s273 = sshll.u32 %s272, 4
          %s274 = int_to_ptr.hbm [resolvable:$true] %s273
          %s275 = sshll.u32 %s268, 4
          %s276 = int_to_ptr.vmem [resolvable:$true] %s275
          %281 = dma.hbm_to_vmem [thread:$0]  %s274, 2048, %s276, %s265, 256, 128, 8
        $region36: #{positionwise_ffn.1} parent=31 // pred_fallthru
          _
        // Predicated region
        $region37: #{positionwise_ffn.1} parent=31 // pred_check
          %p282 = pneg %p145
        $region38: #{positionwise_ffn.1} parent=31 // pred_check_branch
          %284 = sbr.rel (%p282) target = $region40
        $region39: #{positionwise_ffn.1} parent=31 // pred_region
          %p285 = scmp.lt.s32.totalorder %s27, 1
          %s286 = scalar_select %p285, %s27, 1
          %s287 = scalar_lea.vmem %s4, %s286
        $region40: #{positionwise_ffn.1} parent=31 // pred_fallthru
          _
        // Predicated region
        $region41: #{positionwise_ffn.1} parent=31 // pred_check
          %p288 = pneg %p171
        $region42: #{positionwise_ffn.1} parent=31 // pred_check_branch
          %290 = sbr.rel (%p288) target = $region44
        $region43: #{positionwise_ffn.1} parent=31 // pred_region
          %s291 = sand.u32 %s161, 1
          %s292 = scalar_lea.sflag [#allocation7], %s291
          %s293 = sand.u32 %s161, 1
          %s294 = smul.addr %s293, 128
          %s295 = scalar_lea.vmem [#allocation6], %s294
          %s296 = smul.u32 16, %s27
          %298 = vsyncadd %s292, 0
          %s299 = smul.addr %s296, 8
          %s300 = scalar_lea.hbm %s5, %s299
          %s301 = sshll.u32 %s300, 4
          %s302 = int_to_ptr.hbm [resolvable:$true] %s301
          %s303 = sshll.u32 %s295, 4
          %s304 = int_to_ptr.vmem [resolvable:$true] %s303
          %309 = dma.hbm_to_vmem [thread:$0]  %s302, 2048, %s304, %s292, 128, 128, 8
        $region44: #{positionwise_ffn.1} parent=31 // pred_fallthru
          _
      $region32: #{positionwise_ffn.1} parent=5 // pred_fallthru
        _
      %p310 = scmp.le.s32.totalorder 1, %s19
      %p311 = scmp.lt.s32.totalorder %s19, 3
      %p312 = pnand %p310, %p311
      %p313 = pneg %p312
      // Predicated region
      $region45: #{positionwise_ffn.1} parent=5 // pred_check
        _
      $region46: #{positionwise_ffn.1} parent=5 // pred_check_branch
        %315 = sbr.rel (%p312) target = $region48
      $region47: #{positionwise_ffn.1} parent=5 // pred_region
        %s316 = ssub.s32 %s19, 1
        %s317 = sand.u32 %s112, 1
        %s318 = scalar_lea.sflag [#allocation5], %s317
        %s319 = sand.u32 %s112, 1
        %s320 = smul.addr %s319, 128
        %s321 = scalar_lea.vmem [#allocation4], %s320
        // Predicated region
        $region49: #{positionwise_ffn.1} parent=47 // pred_check
          %p322 = pneg %p125
        $region50: #{positionwise_ffn.1} parent=47 // pred_check_branch
          %324 = sbr.rel (%p322) target = $region52
        $region51: #{positionwise_ffn.1} parent=47 // pred_region
          %326 = dma.done %s318, 2048
        $region52: #{positionwise_ffn.1} parent=47 // pred_fallthru
          _
        %s327 = sand.u32 %s164, 1
        %s328 = scalar_lea.sflag [#allocation7], %s327
        %s329 = sand.u32 %s164, 1
        %s330 = smul.addr %s329, 128
        %s331 = scalar_lea.vmem [#allocation6], %s330
        // Predicated region
        $region53: #{positionwise_ffn.1} parent=47 // pred_check
          %p332 = pneg %p177
        $region54: #{positionwise_ffn.1} parent=47 // pred_check_branch
          %334 = sbr.rel (%p332) target = $region56
        $region55: #{positionwise_ffn.1} parent=47 // pred_region
          %336 = dma.done %s328, 2048
        $region56: #{positionwise_ffn.1} parent=47 // pred_fallthru
          _
        %s337 = smul.u32 2, %s28
        %p338 = scmp.lt.s32.totalorder %s337, 1
        %s339 = scalar_select %p338, %s337, 1
        %s340 = smul.addr %s339, 8
        %s341 = scalar_lea.vmem %s0, %s340
        %p342 = pneg %p57
        %p343 = pneg %p54
        %p344 = pneg %p78
        %p345 = pneg %p75
        %p346 = pneg %p99
        %p347 = pneg %p96
        %s348 = sand.u32 %s112, 1
        %s349 = scalar_lea.sflag [#allocation5], %s348
        %s350 = sand.u32 %s112, 1
        %s351 = smul.addr %s350, 128
        %s352 = scalar_lea.vmem [#allocation4], %s351
        %p353 = pneg %p125
        %p354 = pneg %p122
        %p355 = scmp.lt.s32.totalorder %s29, 1
        %s356 = scalar_select %p355, %s29, 1
        %s357 = scalar_lea.vmem %s4, %s356
        %p358 = pneg %p151
        %p359 = pneg %p148
        %s360 = sand.u32 %s164, 1
        %s361 = scalar_lea.sflag [#allocation7], %s360
        %s362 = sand.u32 %s164, 1
        %s363 = smul.addr %s362, 128
        %s364 = scalar_lea.vmem [#allocation6], %s363
        %p365 = pneg %p177
        %p366 = pneg %p174
        %p367 = pneg %p198
        %p368 = pneg %p195
        %p369 = pneg %p224
        %p370 = pneg %p221
        %s371 = smul.u32 2, %s28
        %p372 = scmp.lt.s32.totalorder %s371, 1
        %s373 = scalar_select %p372, %s371, 1
        %s374 = smul.addr %s373, 8
        %s375 = scalar_lea.vmem %s7, %s374
        %s376 = smul.u32 2, %s28
        %p377 = scmp.lt.s32.totalorder %s376, 1
        %s378 = scalar_select %p377, %s376, 1
        %s379 = smul.addr %s378, 8
        %s380 = scalar_lea.vmem %s0, %s379
        %s381 = smul.u32 2, %s28
        %p382 = scmp.lt.s32.totalorder %s29, 1
        %s383 = scalar_select %p382, %s29, 1
        %s384 = scalar_lea.vmem %s4, %s383
        %s385 = smul.u32 16, %s29
        %s386 = smul.u32 2, %s28
        %p387 = scmp.lt.s32.totalorder %s386, 1
        %s388 = scalar_select %p387, %s386, 1
        %s389 = smul.addr %s388, 8
        %s390 = scalar_lea.vmem %s7, %s389
        %s391 = smul.u32 2, %s28
        %p392 = scmp.eq.s32.totalorder %s29, 0
        // Predicated region
        $region57: #{positionwise_ffn.1} parent=47 // pred_check
          %p393 = pneg %p392
        $region58: #{positionwise_ffn.1} parent=47 // pred_check_branch
          %395 = sbr.rel (%p393) target = $region60
        $region59: #{positionwise_ffn.1} parent=47 // pred_region
          %v396 = vld [vmem:[%s380] sm:$0xff]
          %v397 = vld [vmem:[%s380 + $0x8] sm:$0xff]
          %398 = vadd.xlane.f32.xlu0 %v396
          %v399 = vpop.xlane.xlu0 %398
          %400 = vadd.xlane.f32.xlu0 %v397
          %v401 = vpop.xlane.xlu0 %400
          %v402 = vrcp.pop 128.0
          %v403 = vmul.f32 128.0, %v402
          %v404 = vsub.f32 1.0, %v403
          %v405 = vmul.f32 %v402, %v404
          %v406 = vadd.f32 %v402, %v405
          %vm407 = vweird.f32 %v402
          %v408 = vsel %vm407, %v402, %v406
          %v409 = vmul.f32 %v399, %v408
          %v410 = vmul.f32 %v401, %v408
          %v411 = vsub.f32 %v396, %v409
          %v412 = vsub.f32 %v397, %v410
          %v413 = vmul.f32 %v411, %v411
          %v414 = vmul.f32 %v412, %v412
          %415 = vadd.xlane.f32.xlu0 %v413
          %v416 = vpop.xlane.xlu0 %415
          %417 = vadd.xlane.f32.xlu0 %v414
          %v418 = vpop.xlane.xlu0 %417
          %v419 = vmul.f32 %v416, %v408
          %v420 = vmul.f32 %v418, %v408
          %v421 = vadd.f32 %v419, 1e-06
          %v422 = vadd.f32 %v420, 1e-06
          %v423 = vrsqrt.pop %v421
          %v424 = vmul.f32 %v423, %v421
          %v425 = vmul.f32 %v424, %v423
          %v426 = vmul.f32 0.5, %v425
          %v427 = vsub.f32 1.5, %v426
          %v428 = vmul.f32 %v423, %v427
          %vm429 = vweird.f32 %v421
          %vm430 = vweird.f32 %v423
          %vm431 = vmor %vm429, %vm430
          %v432 = vsel %vm431, %v423, %v428
          %v433 = vrsqrt.pop %v422
          %v434 = vmul.f32 %v433, %v422
          %v435 = vmul.f32 %v434, %v433
          %v436 = vmul.f32 0.5, %v435
          %v437 = vsub.f32 1.5, %v436
          %v438 = vmul.f32 %v433, %v437
          %vm439 = vweird.f32 %v422
          %vm440 = vweird.f32 %v433
          %vm441 = vmor %vm439, %vm440
          %v442 = vsel %vm441, %v433, %v438
          %v443 = vmul.f32 %v411, %v432
          %v444 = vmul.f32 %v412, %v442
          %v445 = vld [vmem:[%s1] sm:$0x1]
          %v447 = vperm.slane %v445, 0
          %v449 = vmul.f32 %v443, %v447
          %v450 = vmul.f32 %v444, %v447
          %v451 = vld [vmem:[%s2] sm:$0x1]
          %v453 = vperm.slane %v451, 0
          %v455 = vadd.f32 %v449, %v453
          %v456 = vadd.f32 %v450, %v453
          %457 = vst [vmem:[#allocation2] sm:$0xff] %v455
          %458 = vst [vmem:[#allocation2 + $0x8] sm:$0xff] %v456
        $region60: #{positionwise_ffn.1} parent=47 // pred_fallthru
          _
        %v459 = vld [vmem:[#allocation2] sm:$0xff]
        %v460 = vld [vmem:[#allocation2 + $0x8] sm:$0xff]
        %v461 = vld [vmem:[%s321] sm:$0xff]
        %v462 = vld [vmem:[%s321 + $0x8] sm:$0xff]
        %v463 = vld [vmem:[%s321 + $0x10] sm:$0xff]
        %v464 = vld [vmem:[%s321 + $0x18] sm:$0xff]
        %v465 = vld [vmem:[%s321 + $0x20] sm:$0xff]
        %v466 = vld [vmem:[%s321 + $0x28] sm:$0xff]
        %v467 = vld [vmem:[%s321 + $0x30] sm:$0xff]
        %v468 = vld [vmem:[%s321 + $0x38] sm:$0xff]
        %v469 = vld [vmem:[%s321 + $0x40] sm:$0xff]
        %v470 = vld [vmem:[%s321 + $0x48] sm:$0xff]
        %v471 = vld [vmem:[%s321 + $0x50] sm:$0xff]
        %v472 = vld [vmem:[%s321 + $0x58] sm:$0xff]
        %v473 = vld [vmem:[%s321 + $0x60] sm:$0xff]
        %v474 = vld [vmem:[%s321 + $0x68] sm:$0xff]
        %v475 = vld [vmem:[%s321 + $0x70] sm:$0xff]
        %v476 = vld [vmem:[%s321 + $0x78] sm:$0xff]
        %v477 = vld [vmem:[%s384] sm:$0x1]
        %v479 = vperm.slane %v477, 0
        %481 = vmatpush.msra.mxu0 %v476
        %482 = vmatpush.msra.mxu0 %v475
        %483 = vmatpush.msra.mxu0 %v474
        %484 = vmatpush.msra.mxu0 %v473
        %485 = vmatpush.msra.mxu0 %v472
        %486 = vmatpush.msra.mxu0 %v471
        %487 = vmatpush.msra.mxu0 %v470
        %488 = vmatpush.msra.mxu0 %v469
        %489 = vmatpush.msra.mxu0 %v468
        %490 = vmatpush.msra.mxu0 %v467
        %491 = vmatpush.msra.mxu0 %v466
        %492 = vmatpush.msra.mxu0 %v465
        %493 = vmatpush.msra.mxu0 %v464
        %494 = vmatpush.msra.mxu0 %v463
        %495 = vmatpush.msra.mxu0 %v462
        %496 = vmatpush.msra.mxu0 %v461
        %497 = vmatmul.f32.gmra.mxu0 %v459
        %v498 = vpop.f32.mrf.mxu0
        %v499 = vadd.f32 %v479, %v498
        %500 = vmatmul.f32.gmra.mxu0 %v460
        %v501 = vpop.f32.mrf.mxu0
        %v502 = vadd.f32 %v479, %v501
        %503 = vdwg.mxu0
        %v504 = vmax.f32 %v499, 0.0
        %v505 = vmax.f32 %v502, 0.0
        %v506 = vld [vmem:[%s331] sm:$0xff]
        %v507 = vld [vmem:[%s331 + $0x8] sm:$0xff]
        %v508 = vld [vmem:[%s331 + $0x10] sm:$0xff]
        %v509 = vld [vmem:[%s331 + $0x18] sm:$0xff]
        %v510 = vld [vmem:[%s331 + $0x20] sm:$0xff]
        %v511 = vld [vmem:[%s331 + $0x28] sm:$0xff]
        %v512 = vld [vmem:[%s331 + $0x30] sm:$0xff]
        %v513 = vld [vmem:[%s331 + $0x38] sm:$0xff]
        %v514 = vld [vmem:[%s331 + $0x40] sm:$0xff]
        %v515 = vld [vmem:[%s331 + $0x48] sm:$0xff]
        %v516 = vld [vmem:[%s331 + $0x50] sm:$0xff]
        %v517 = vld [vmem:[%s331 + $0x58] sm:$0xff]
        %v518 = vld [vmem:[%s331 + $0x60] sm:$0xff]
        %v519 = vld [vmem:[%s331 + $0x68] sm:$0xff]
        %v520 = vld [vmem:[%s331 + $0x70] sm:$0xff]
        %v521 = vld [vmem:[%s331 + $0x78] sm:$0xff]
        %522 = vmatpush.msra.mxu0 %v521
        %523 = vmatpush.msra.mxu0 %v520
        %524 = vmatpush.msra.mxu0 %v519
        %525 = vmatpush.msra.mxu0 %v518
        %526 = vmatpush.msra.mxu0 %v517
        %527 = vmatpush.msra.mxu0 %v516
        %528 = vmatpush.msra.mxu0 %v515
        %529 = vmatpush.msra.mxu0 %v514
        %530 = vmatpush.msra.mxu0 %v513
        %531 = vmatpush.msra.mxu0 %v512
        %532 = vmatpush.msra.mxu0 %v511
        %533 = vmatpush.msra.mxu0 %v510
        %534 = vmatpush.msra.mxu0 %v509
        %535 = vmatpush.msra.mxu0 %v508
        %536 = vmatpush.msra.mxu0 %v507
        %537 = vmatpush.msra.mxu0 %v506
        %538 = vmatmul.f32.gmra.mxu0 %v504
        %v539 = vpop.f32.mrf.mxu0
        %v540 = vadd.f32 0.0, %v539
        %541 = vmatmul.f32.gmra.mxu0 %v505
        %v542 = vpop.f32.mrf.mxu0
        %v543 = vadd.f32 0.0, %v542
        %544 = vdwg.mxu0
        // Predicated region
        $region61: #{positionwise_ffn.1} parent=47 // pred_check
          %p545 = pneg %p392
        $region62: #{positionwise_ffn.1} parent=47 // pred_check_branch
          %547 = sbr.rel (%p545) target = $region64
        $region63: #{positionwise_ffn.1} parent=47 // pred_region
          %548 = vst [vmem:[#allocation3] sm:$0xff] %v540
          %549 = vst [vmem:[#allocation3 + $0x8] sm:$0xff] %v543
        $region64: #{positionwise_ffn.1} parent=47 // pred_fallthru
          _
        %p550 = scmp.gt.s32.totalorder %s29, 0
        // Predicated region
        $region65: #{positionwise_ffn.1} parent=47 // pred_check
          %p551 = pneg %p550
        $region66: #{positionwise_ffn.1} parent=47 // pred_check_branch
          %553 = sbr.rel (%p551) target = $region68
        $region67: #{positionwise_ffn.1} parent=47 // pred_region
          %v554 = vld [vmem:[#allocation3] sm:$0xff]
          %v555 = vld [vmem:[#allocation3 + $0x8] sm:$0xff]
          %v556 = vadd.f32 %v554, %v540
          %v557 = vadd.f32 %v555, %v543
          %558 = vst [vmem:[#allocation3] sm:$0xff] %v556
          %559 = vst [vmem:[#allocation3 + $0x8] sm:$0xff] %v557
        $region68: #{positionwise_ffn.1} parent=47 // pred_fallthru
          _
        %p560 = scmp.eq.s32.totalorder %s29, 1
        // Predicated region
        $region69: #{positionwise_ffn.1} parent=47 // pred_check
          %p561 = pneg %p560
        $region70: #{positionwise_ffn.1} parent=47 // pred_check_branch
          %563 = sbr.rel (%p561) target = $region72
        $region71: #{positionwise_ffn.1} parent=47 // pred_region
          %v564 = vld [vmem:[#allocation3] sm:$0xff]
          %v565 = vld [vmem:[#allocation3 + $0x8] sm:$0xff]
          %v566 = vld [vmem:[%s6] sm:$0x1]
          %v568 = vperm.slane %v566, 0
          %v570 = vadd.f32 %v564, %v568
          %v571 = vadd.f32 %v565, %v568
          %v572 = vld [vmem:[%s380] sm:$0xff]
          %v573 = vld [vmem:[%s380 + $0x8] sm:$0xff]
          %v574 = vadd.f32 %v570, %v572
          %v575 = vadd.f32 %v571, %v573
          %576 = vst [vmem:[%s390] sm:$0xff] %v574
          %577 = vst [vmem:[%s390 + $0x8] sm:$0xff] %v575
        $region72: #{positionwise_ffn.1} parent=47 // pred_fallthru
          _
        %s578 = smul.u32 2, %s28
        %p579 = scmp.lt.s32.totalorder %s578, 1
        %s580 = scalar_select %p579, %s578, 1
        %s581 = smul.addr %s580, 8
        %s582 = scalar_lea.vmem %s7, %s581
        // Predicated region
        $region73: #{positionwise_ffn.1} parent=47 // pred_check
          %p583 = pneg %p221
        $region74: #{positionwise_ffn.1} parent=47 // pred_check_branch
          %585 = sbr.rel (%p583) target = $region76
        $region75: #{positionwise_ffn.1} parent=47 // pred_region
          %s586 = smul.u32 2, %s28
        $region76: #{positionwise_ffn.1} parent=47 // pred_fallthru
          _
        // Predicated region
        $region77: #{positionwise_ffn.1} parent=47 // pred_check
          %p587 = pneg %p221
        $region78: #{positionwise_ffn.1} parent=47 // pred_check_branch
          %589 = sbr.rel (%p587) target = $region80
        $region79: #{positionwise_ffn.1} parent=47 // pred_region
          %s590 = smul.u32 2, %s28
          %p591 = scmp.lt.s32.totalorder %s590, 1
          %s592 = scalar_select %p591, %s590, 1
          %s593 = smul.addr %s592, 8
          %s594 = scalar_lea.vmem %s7, %s593
        $region80: #{positionwise_ffn.1} parent=47 // pred_fallthru
          _
      $region48: #{positionwise_ffn.1} parent=5 // pred_fallthru
        _
      %p595 = scmp.le.s32.totalorder 2, %s19
      // Predicated region
      $region81: #{positionwise_ffn.1} parent=5 // pred_check
        %p596 = pneg %p595
      $region82: #{positionwise_ffn.1} parent=5 // pred_check_branch
        %598 = sbr.rel (%p596) target = $region84
      $region83: #{positionwise_ffn.1} parent=5 // pred_region
        %s599 = ssub.s32 %s19, 2
      $region84: #{positionwise_ffn.1} parent=5 // pred_fallthru
        _
    $region6: #{positionwise_ffn.1} parent=1 // loop_footer
      %s23 = sadd.s32 1, %s19
    $region7: #{positionwise_ffn.1} parent=1 // loop_footer_branch
      %18 = sbr.rel target = $region3
    $region8: #{positionwise_ffn.1} parent=1 // loop_exit
      _
    %600 = vsyncpa [#allocation5], 1
    %s601 = scalar_lea.sflag [#allocation5], 1
    %602 = vsyncpa %s601, 1
    %603 = vsyncpa [#allocation7], 1
    %s604 = scalar_lea.sflag [#allocation7], 1
    %605 = vsyncpa %s604, 1

</llo_original>
